<compile_context>
chip_gen: v7x
topology: tpu7x:2x2x1
jax: 0.10.0
libtpu: 0.0.40
codegen_flags: <defaults>
</compile_context>

<pallas_src>
import jax
import jax.numpy as jnp
from jax.experimental import pallas as pl
from jax.experimental.pallas import tpu as pltpu

HIDDEN = 128
N_COND = 2
N_IMPR = 5
HEAD_PAD = 128          # lane-dense fused head output width
_SUBLANE = 16           # bf16 sublane packing granularity (safe on all gens)


def _round_up(n, m):
    return (n + m - 1) // m * m


def building_model_kernel(x_ref, w1_ref, b1_ref, wh_ref, bh_ref, out_ref):
    # fc1 (bf16 operands, f32 accumulate) + bias + ReLU
    h = jnp.dot(x_ref[...], w1_ref[...],
                preferred_element_type=jnp.float32) + b1_ref[...]
    h = jnp.maximum(h, 0.0)
    # dropout(p=0.2) is identity in inference/eval mode
    # TODO(synk): training-mode dropout (random mask + 1/(1-p) scale) not implemented
    # fused heads: cols [0:2] = condition logits, cols [2:7] = improvements,
    # cols [7:128] = zero padding -> one matmul, one lane-dense store
    y = jnp.dot(h.astype(jnp.bfloat16), wh_ref[...],
                preferred_element_type=jnp.float32) + bh_ref[...]
    col = jax.lax.broadcasted_iota(jnp.int32, y.shape, 1)
    sig_cols = (col >= N_COND) & (col < N_COND + N_IMPR)
    out_ref[...] = jnp.where(sig_cols, jax.nn.sigmoid(y), y)


def building_model_forward(x, packed, *, batch_tile=256):
    """BuildingModel forward as a batch-tiled Pallas TPU kernel.

    x:      (B, input_dim) float32
    packed: dict from pack_params() -- bf16 matmul weights, f32 biases,
            heads fused & zero-padded to 128 output lanes.
    returns (condition_out (B, 2), improvements_out (B, 5)) float32
    """
    B, D = x.shape
    assert batch_tile % _SUBLANE == 0
    tb = min(batch_tile, _round_up(B, _SUBLANE))
    b_pad = _round_up(B, tb)
    grid = (b_pad // tb,)

    x_p = x if b_pad == B else jnp.pad(x, ((0, b_pad - B), (0, 0)))
    x_bf16 = x_p.astype(jnp.bfloat16)

    out = pl.pallas_call(
        building_model_kernel,
        out_shape=jax.ShapeDtypeStruct((b_pad, HEAD_PAD), jnp.float32),
        grid=grid,
        in_specs=[
            pl.BlockSpec((tb, D), lambda i: (i, 0)),             # x tile
            pl.BlockSpec((D, HIDDEN), lambda i: (0, 0)),         # w1  (resident)
            pl.BlockSpec((1, HIDDEN), lambda i: (0, 0)),         # b1  (resident)
            pl.BlockSpec((HIDDEN, HEAD_PAD), lambda i: (0, 0)),  # fused head W
            pl.BlockSpec((1, HEAD_PAD), lambda i: (0, 0)),       # fused head b
        ],
        out_specs=pl.BlockSpec((tb, HEAD_PAD), lambda i: (i, 0)),
        compiler_params=pltpu.CompilerParams(
            dimension_semantics=("parallel",),
            vmem_limit_bytes=32 * 1024 * 1024),
    )(x_bf16, packed["w1"], packed["b1"], packed["w_heads"], packed["b_heads"])

    cond = out[:B, :N_COND]
    impr = out[:B, N_COND:N_COND + N_IMPR]
    return cond, impr


def init_params(key, input_dim):
    """Deterministic synthetic init (PyTorch-like uniform fan-in scaling)."""
    ks = jax.random.split(key, 6)

    def unif(k, shape, fan_in):
        bound = 1.0 / jnp.sqrt(fan_in)
        return jax.random.uniform(k, shape, jnp.float32, -bound, bound)

    return {
        "w1": unif(ks[0], (input_dim, HIDDEN), input_dim),
        "b1": unif(ks[1], (1, HIDDEN), input_dim),
        "wc": unif(ks[2], (HIDDEN, N_COND), HIDDEN),
        "bc": unif(ks[3], (1, N_COND), HIDDEN),
        "wi": unif(ks[4], (HIDDEN, N_IMPR), HIDDEN),
        "bi": unif(ks[5], (1, N_IMPR), HIDDEN),
    }


def pack_params(params):
    """One-time offline prep: fuse heads, pad to 128 lanes, cast matmul W to bf16."""
    w_heads = jnp.zeros((HIDDEN, HEAD_PAD), jnp.float32)
    w_heads = w_heads.at[:, :N_COND].set(params["wc"])
    w_heads = w_heads.at[:, N_COND:N_COND + N_IMPR].set(params["wi"])
    b_heads = jnp.zeros((1, HEAD_PAD), jnp.float32)
    b_heads = b_heads.at[:, :N_COND].set(params["bc"])
    b_heads = b_heads.at[:, N_COND:N_COND + N_IMPR].set(params["bi"])
    return {
        "w1": params["w1"].astype(jnp.bfloat16),
        "b1": params["b1"],
        "w_heads": w_heads.astype(jnp.bfloat16),
        "b_heads": b_heads,
    }


def reference_forward(x, packed):
    """Pure-XLA reference with the same bf16-operand / f32-accumulate math."""
    h = jnp.dot(x.astype(jnp.bfloat16), packed["w1"],
                preferred_element_type=jnp.float32) + packed["b1"]
    h = jnp.maximum(h, 0.0)
    y = jnp.dot(h.astype(jnp.bfloat16), packed["w_heads"],
                preferred_element_type=jnp.float32) + packed["b_heads"]
    return y[:, :N_COND], jax.nn.sigmoid(y[:, N_COND:N_COND + N_IMPR])


if __name__ == "__main__":
    key = jax.random.PRNGKey(0)
    k_x, k_p = jax.random.split(key)

    batch, input_dim = 8, 32
    x = jax.random.normal(k_x, (batch, input_dim), jnp.float32)
    params = init_params(k_p, input_dim)
    packed = pack_params(params)

    cond_out, impr_out = building_model_forward(x, packed)
    jax.block_until_ready((cond_out, impr_out))

    cond_ref, impr_ref = reference_forward(x, packed)
    assert cond_out.shape == (batch, N_COND)
    assert impr_out.shape == (batch, N_IMPR)
    assert jnp.allclose(cond_out, cond_ref, atol=1e-4, rtol=1e-4)
    assert jnp.allclose(impr_out, impr_ref, atol=1e-4, rtol=1e-4)

    print("KERNEL_OK")
</pallas_src>

<mosaic_0001>
module attributes {stable_mosaic.version = 11 : i64} {
  func.func @building_model_kernel(%arg0: i32, %arg1: memref<16x32xbf16, #tpu.memory_space<vmem>>, %arg2: memref<32x128xbf16, #tpu.memory_space<vmem>>, %arg3: memref<1x128xf32, #tpu.memory_space<vmem>>, %arg4: memref<128x128xbf16, #tpu.memory_space<vmem>>, %arg5: memref<1x128xf32, #tpu.memory_space<vmem>>, %arg6: memref<16x128xf32, #tpu.memory_space<vmem>>) attributes {dimension_semantics = [#tpu.dimension_semantics<parallel>], iteration_bounds = array<i64: 1>, scalar_prefetch = 0 : i64, scratch_operands = 0 : i64, tpu.core_type = #tpu.core_type<tc>, window_params = [{transform_indices = @transform_0, window_bounds = array<i64: 16, 32>}, {pipeline_mode = #tpu.pipeline_mode<synchronous>, transform_indices = @transform_1, window_bounds = array<i64: 32, 128>}, {pipeline_mode = #tpu.pipeline_mode<synchronous>, transform_indices = @transform_2, window_bounds = array<i64: 1, 128>}, {pipeline_mode = #tpu.pipeline_mode<synchronous>, transform_indices = @transform_3, window_bounds = array<i64: 128, 128>}, {pipeline_mode = #tpu.pipeline_mode<synchronous>, transform_indices = @transform_4, window_bounds = array<i64: 1, 128>}, {transform_indices = @transform_5, window_bounds = array<i64: 16, 128>}]} {
    %c0 = arith.constant 0 : index
    %c0_0 = arith.constant 0 : index
    %0 = vector.load %arg1[%c0, %c0_0] : memref<16x32xbf16, #tpu.memory_space<vmem>>, vector<16x32xbf16>
    %c0_1 = arith.constant 0 : index
    %c0_2 = arith.constant 0 : index
    %1 = vector.load %arg2[%c0_1, %c0_2] : memref<32x128xbf16, #tpu.memory_space<vmem>>, vector<32x128xbf16>
    %cst = arith.constant dense<0.000000e+00> : vector<16x128xf32>
    %2 = tpu.matmul %0, %1, %cst {dimension_numbers = #tpu.dot_dimension_numbers<[1], [0], [0], [1], [0, 0, 1, 1], [], []>} : vector<16x32xbf16>, vector<32x128xbf16>, vector<16x128xf32> -> vector<16x128xf32>
    %c0_3 = arith.constant 0 : index
    %c0_4 = arith.constant 0 : index
    %3 = vector.load %arg3[%c0_3, %c0_4] : memref<1x128xf32, #tpu.memory_space<vmem>>, vector<1x128xf32>
    %4 = vector.broadcast %3 : vector<1x128xf32> to vector<16x128xf32>
    %5 = arith.addf %2, %4 : vector<16x128xf32>
    %cst_5 = arith.constant 0.000000e+00 : f32
    %6 = vector.broadcast %cst_5 : f32 to vector<16x128xf32>
    %7 = arith.maximumf %5, %6 : vector<16x128xf32>
    %8 = arith.truncf %7 : vector<16x128xf32> to vector<16x128xbf16>
    %c0_6 = arith.constant 0 : index
    %c0_7 = arith.constant 0 : index
    %9 = vector.load %arg4[%c0_6, %c0_7] : memref<128x128xbf16, #tpu.memory_space<vmem>>, vector<128x128xbf16>
    %cst_8 = arith.constant dense<0.000000e+00> : vector<16x128xf32>
    %10 = tpu.matmul %8, %9, %cst_8 {dimension_numbers = #tpu.dot_dimension_numbers<[1], [0], [0], [1], [0, 0, 1, 1], [], []>} : vector<16x128xbf16>, vector<128x128xbf16>, vector<16x128xf32> -> vector<16x128xf32>
    %c0_9 = arith.constant 0 : index
    %c0_10 = arith.constant 0 : index
    %11 = vector.load %arg5[%c0_9, %c0_10] : memref<1x128xf32, #tpu.memory_space<vmem>>, vector<1x128xf32>
    %12 = vector.broadcast %11 : vector<1x128xf32> to vector<16x128xf32>
    %13 = arith.addf %10, %12 : vector<16x128xf32>
    %14 = tpu.iota {dimensions = array<i32: 1>} : vector<16x128xi32>
    %c2_i32 = arith.constant 2 : i32
    %15 = vector.broadcast %c2_i32 : i32 to vector<16x128xi32>
    %16 = arith.cmpi sge, %14, %15 : vector<16x128xi32>
    %c7_i32 = arith.constant 7 : i32
    %17 = vector.broadcast %c7_i32 : i32 to vector<16x128xi32>
    %18 = arith.cmpi slt, %14, %17 : vector<16x128xi32>
    %19 = arith.andi %16, %18 : vector<16x128xi1>
    %20 = arith.negf %13 : vector<16x128xf32>
    %21 = math.exp %20 : vector<16x128xf32>
    %cst_11 = arith.constant 1.000000e+00 : f32
    %22 = vector.broadcast %cst_11 : f32 to vector<16x128xf32>
    %23 = arith.addf %22, %21 : vector<16x128xf32>
    %24 = arith.divf %22, %23 : vector<16x128xf32>
    %25 = arith.select %19, %24, %13 : vector<16x128xi1>, vector<16x128xf32>
    %c0_12 = arith.constant 0 : index
    %c0_13 = arith.constant 0 : index
    %26 = vector.load %arg6[%c0_12, %c0_13] : memref<16x128xf32, #tpu.memory_space<vmem>>, vector<16x128xf32>
    tpu.vector_store %arg6[%c0_12, %c0_13], %25 {strides = array<i32>} : memref<16x128xf32, #tpu.memory_space<vmem>>, vector<16x128xf32>,
    return
  }
  func.func @transform_0(%arg0: i32) -> (i32, i32) {
    %c0_i32 = arith.constant 0 : i32
    %c0_i32_0 = arith.constant 0 : i32
    return %arg0, %c0_i32 : i32, i32
  }
  func.func @transform_1(%arg0: i32) -> (i32, i32) {
    %c0_i32 = arith.constant 0 : i32
    %c0_i32_0 = arith.constant 0 : i32
    %c0_i32_1 = arith.constant 0 : i32
    return %c0_i32, %c0_i32_0 : i32, i32
  }
  func.func @transform_2(%arg0: i32) -> (i32, i32) {
    %c0_i32 = arith.constant 0 : i32
    %c0_i32_0 = arith.constant 0 : i32
    %c0_i32_1 = arith.constant 0 : i32
    return %c0_i32, %c0_i32_0 : i32, i32
  }
  func.func @transform_3(%arg0: i32) -> (i32, i32) {
    %c0_i32 = arith.constant 0 : i32
    %c0_i32_0 = arith.constant 0 : i32
    %c0_i32_1 = arith.constant 0 : i32
    return %c0_i32, %c0_i32_0 : i32, i32
  }
  func.func @transform_4(%arg0: i32) -> (i32, i32) {
    %c0_i32 = arith.constant 0 : i32
    %c0_i32_0 = arith.constant 0 : i32
    %c0_i32_1 = arith.constant 0 : i32
    return %c0_i32, %c0_i32_0 : i32, i32
  }
  func.func @transform_5(%arg0: i32) -> (i32, i32) {
    %c0_i32 = arith.constant 0 : i32
    %c0_i32_0 = arith.constant 0 : i32
    return %arg0, %c0_i32 : i32, i32
  }
}

</mosaic_0001>

<llo_original>
// kernel: tpu_custom_call.1
$region0: #{tpu_custom_call.1}
  #allocation0 [shape = 'u32[]', space=smem, size = 0x4, offset = 0x4, fixed_abs, tag = 'smem constant byte address 0x4 - core index']
  #allocation1 [shape = 'u32[144,128]{1,0:T(1,128)}', space=vmem, size = 0x12000, scoped, tag = 'internal scratch']
  %s0 = inlined_call_operand.hbm [shape: bf16[16,32], index: 0, kind: input, shape index: {}]
  %s1 = inlined_call_operand.hbm [shape: bf16[32,128], index: 1, kind: input, shape index: {}]
  %s2 = inlined_call_operand.vmem [shape: f32[1,128], index: 2, kind: input, shape index: {}]
  %s3 = inlined_call_operand.hbm [shape: bf16[128,128], index: 3, kind: input, shape index: {}]
  %s4 = inlined_call_operand.vmem [shape: f32[1,128], index: 4, kind: input, shape index: {}]
  %s5 = inlined_call_operand.hbm [shape: f32[16,128], index: 5, kind: output, shape index: {}]
  %s6 = sld [smem:[#allocation0]]
  $region42: #{tpu_custom_call.1} parent=0
    _
  %s8 = ssub.s32 1, %s6
  %s9 = scalar_select 0, %s8, %s6
  $region1: #{tpu_custom_call.1} parent=0
    #allocation2 [shape = 'u8[4096]{0}', space=vmem, size = 0x1000, scoped, tag = 'input window, operand 0, single buffered']
    #allocation3 [shape = 's32[1]{0}', space=sflag, size = 0x4, scoped, tag = 'scoped memory for tpu_custom_call.1']
    #allocation4 [shape = 's32[1]{0}', space=sflag, size = 0x4, scoped, tag = 'scoped memory for tpu_custom_call.1']
    #allocation5 [shape = 'u8[8192]{0}', space=vmem, size = 0x2000, scoped, tag = 'input window, operand 1, single buffered']
    #allocation6 [shape = 's32[1]{0}', space=sflag, size = 0x4, scoped, tag = 'scoped memory for tpu_custom_call.1']
    #allocation7 [shape = 'u8[32768]{0}', space=vmem, size = 0x8000, scoped, tag = 'input window, operand 3, single buffered']
    #allocation8 [shape = 'u8[8192]{0}', space=vmem, size = 0x2000, scoped, tag = 'output window, operand 0, single buffered']
    %10 = vsyncpa [#allocation3], 0
    %11 = vsyncpa [#allocation6], 0
    %12 = vsyncpa [#allocation4], 0
    // Predicated region
    $region2: #{tpu_custom_call.1} parent=1 // pred_check
      _
    $region3: #{tpu_custom_call.1} parent=1 // pred_check_branch
      %14 = sbr.rel (0) target = $region5
    $region4: #{tpu_custom_call.1} parent=1 // pred_region
      %s16 = ssub.s32 128, 128
      %17 = vsyncadd [#allocation3], %s16
      %s18 = sshll.u32 [#allocation2], 4
      %s19 = int_to_ptr.vmem [resolvable:$true] %s18
      %24 = dma.hbm_to_vmem [thread:$0]  %s0, 128, %s19, [#allocation3], 64, 64, 4
    $region5: #{tpu_custom_call.1} parent=1 // pred_fallthru
      _
    // Predicated region
    $region6: #{tpu_custom_call.1} parent=1 // pred_check
      _
    $region7: #{tpu_custom_call.1} parent=1 // pred_check_branch
      %26 = sbr.rel (0) target = $region9
    $region8: #{tpu_custom_call.1} parent=1 // pred_region
      %s28 = ssub.s32 256, 256
      %29 = vsyncadd [#allocation6], %s28
      %s30 = sshll.u32 [#allocation5], 4
      %s31 = int_to_ptr.vmem [resolvable:$true] %s30
      %36 = dma.hbm_to_vmem [thread:$0]  %s1, 256, %s31, [#allocation6], 64, 64, 4
    $region9: #{tpu_custom_call.1} parent=1 // pred_fallthru
      _
    // Predicated region
    $region10: #{tpu_custom_call.1} parent=1 // pred_check
      _
    $region11: #{tpu_custom_call.1} parent=1 // pred_check_branch
      %38 = sbr.rel (0) target = $region13
    $region12: #{tpu_custom_call.1} parent=1 // pred_region
      _
    $region13: #{tpu_custom_call.1} parent=1 // pred_fallthru
      _
    // Predicated region
    $region14: #{tpu_custom_call.1} parent=1 // pred_check
      _
    $region15: #{tpu_custom_call.1} parent=1 // pred_check_branch
      %40 = sbr.rel (0) target = $region17
    $region16: #{tpu_custom_call.1} parent=1 // pred_region
      %s42 = ssub.s32 1024, 1024
      %43 = vsyncadd [#allocation6], %s42
      %s44 = sshll.u32 [#allocation7], 4
      %s45 = int_to_ptr.vmem [resolvable:$true] %s44
      %50 = dma.hbm_to_vmem [thread:$0]  %s3, 1024, %s45, [#allocation6], 64, 64, 4
    $region17: #{tpu_custom_call.1} parent=1 // pred_fallthru
      _
    // Predicated region
    $region18: #{tpu_custom_call.1} parent=1 // pred_check
      _
    $region19: #{tpu_custom_call.1} parent=1 // pred_check_branch
      %52 = sbr.rel (0) target = $region21
    $region20: #{tpu_custom_call.1} parent=1 // pred_region
      _
    $region21: #{tpu_custom_call.1} parent=1 // pred_fallthru
      _
    // Predicated region
    $region22: #{tpu_custom_call.1} parent=1 // pred_check
      _
    $region23: #{tpu_custom_call.1} parent=1 // pred_check_branch
      %54 = sbr.rel (0) target = $region25
    $region24: #{tpu_custom_call.1} parent=1 // pred_region
      %55 = dma.done [#allocation3], 128
    $region25: #{tpu_custom_call.1} parent=1 // pred_fallthru
      _
    // Predicated region
    $region26: #{tpu_custom_call.1} parent=1 // pred_check
      _
    $region27: #{tpu_custom_call.1} parent=1 // pred_check_branch
      %57 = sbr.rel (0) target = $region29
    $region28: #{tpu_custom_call.1} parent=1 // pred_region
      %58 = dma.done [#allocation6], 256
    $region29: #{tpu_custom_call.1} parent=1 // pred_fallthru
      _
    // Predicated region
    $region30: #{tpu_custom_call.1} parent=1 // pred_check
      _
    $region31: #{tpu_custom_call.1} parent=1 // pred_check_branch
      %60 = sbr.rel (0) target = $region33
    $region32: #{tpu_custom_call.1} parent=1 // pred_region
      %61 = dma.done [#allocation6], 1024
    $region33: #{tpu_custom_call.1} parent=1 // pred_fallthru
      _
    %v63 = vld [vmem:[#allocation2] sm:$0xf]
    %v64 = vld [vmem:[#allocation2 + $0x4] sm:$0xf]
    %v65 = vld [vmem:[#allocation5] sm:$0xf]
    %v66 = vld [vmem:[#allocation5 + $0x4] sm:$0xf]
    %v67 = vld [vmem:[#allocation5 + $0x8] sm:$0xf]
    %v68 = vld [vmem:[#allocation5 + $0xc] sm:$0xf]
    %v69 = vld [vmem:[%s2] sm:$0x1]
    %v71 = vlaneseq
    %v72 = vshrl.u32 %v71, 7
    %v73 = vsub.s32 0, %v72
    %v74 = vrot.slane %v69, %v73
    %v78 = vunpack.c.l.b16 %v63
    %v79 = vunpack.c.l.b16 %v64
    %v80 = vpack.c.b16 %v79, %v78
    %v85 = vunpack.c.l.b16 %v65
    %v86 = vunpack.c.l.b16 %v66
    %v87 = vunpack.c.l.b16 %v67
    %v88 = vunpack.c.l.b16 %v68
    %v89 = vpack.c.b16 %v86, %v85
    %v90 = vpack.c.b16 %v88, %v87
    %vm93 = vcmask 261120
    %v95 = vsel %vm93, %v80, 0
    %97 = vmatprep.subr.bf16.mxu0 0
    %98 = vmatpush1.bf16.msra.mxu0 %v89
    %99 = vmatprep.subr.bf16.mxu0 0
    %100 = vmatpush1.bf16.msra.mxu0 %v90
    %101 = vmatprep.subr.bf16.mxu0 0
    %102 = vmatpush1.bf16.msra.mxu0 0
    %103 = vmatprep.subr.bf16.mxu0 0
    %104 = vmatpush1.bf16.msra.mxu0 0
    %105 = vmatprep.subr.bf16.mxu0 0
    %106 = vmatpush1.bf16.msra.mxu0 0
    %107 = vmatprep.subr.bf16.mxu0 0
    %108 = vmatpush1.bf16.msra.mxu0 0
    %109 = vmatprep.subr.bf16.mxu0 0
    %110 = vmatpush1.bf16.msra.mxu0 0
    %111 = vmatprep.subr.bf16.mxu0 0
    %112 = vmatpush1.bf16.msra.mxu0 0
    %113 = vmatprep.subr.bf16.mxu0 0
    %114 = vmatpush1.bf16.msra.mxu0 0
    %115 = vmatprep.subr.bf16.mxu0 0
    %116 = vmatpush1.bf16.msra.mxu0 0
    %117 = vmatprep.subr.bf16.mxu0 0
    %118 = vmatpush1.bf16.msra.mxu0 0
    %119 = vmatprep.subr.bf16.mxu0 0
    %120 = vmatpush1.bf16.msra.mxu0 0
    %121 = vmatprep.subr.bf16.mxu0 0
    %122 = vmatpush1.bf16.msra.mxu0 0
    %123 = vmatprep.subr.bf16.mxu0 0
    %124 = vmatpush1.bf16.msra.mxu0 0
    %125 = vmatprep.subr.bf16.mxu0 0
    %126 = vmatpush1.bf16.msra.mxu0 0
    %127 = vmatprep.subr.bf16.mxu0 0
    %128 = vmatpush1.bf16.msra.mxu0 0
    %129 = vmatprep.mubr.bf16.mxu0 0
    %130 = vmatmul.mubr.bf16.gmra.mrb[0].mxu0 %v95
    %v131 = vpop.f32.mrb[0].mxu0
    %v132 = vadd.f32 %v74, %v131
    %v133 = vpop.f32.mrb[0].mxu0
    %v134 = vpop.f32.mrb[0].mxu0
    %v135 = vadd.f32 %v74, %v134
    %v136 = vpop.f32.mrb[0].mxu0
    %137 = vdwg.mxu0
    %v138 = vmax.f32 %v132, 0.0
    %v139 = vmax.f32 %v135, 0.0
    %v140 = vpack.c.bf16 %v139, %v138
    %v141 = vld [vmem:[#allocation7] sm:$0xf]
    %v142 = vld [vmem:[#allocation7 + $0x4] sm:$0xf]
    %v143 = vld [vmem:[#allocation7 + $0x8] sm:$0xf]
    %v144 = vld [vmem:[#allocation7 + $0xc] sm:$0xf]
    %v145 = vld [vmem:[#allocation7 + $0x10] sm:$0xf]
    %v146 = vld [vmem:[#allocation7 + $0x14] sm:$0xf]
    %v147 = vld [vmem:[#allocation7 + $0x18] sm:$0xf]
    %v148 = vld [vmem:[#allocation7 + $0x1c] sm:$0xf]
    %v149 = vld [vmem:[#allocation7 + $0x20] sm:$0xf]
    %v150 = vld [vmem:[#allocation7 + $0x24] sm:$0xf]
    %v151 = vld [vmem:[#allocation7 + $0x28] sm:$0xf]
    %v152 = vld [vmem:[#allocation7 + $0x2c] sm:$0xf]
    %v153 = vld [vmem:[#allocation7 + $0x30] sm:$0xf]
    %v154 = vld [vmem:[#allocation7 + $0x34] sm:$0xf]
    %v155 = vld [vmem:[#allocation7 + $0x38] sm:$0xf]
    %v156 = vld [vmem:[#allocation7 + $0x3c] sm:$0xf]
    %v157 = vld [vmem:[%s4] sm:$0x1]
    %v159 = vlaneseq
    %v160 = vshrl.u32 %v159, 7
    %v161 = vsub.s32 0, %v160
    %v162 = vrot.slane %v157, %v161
    %v180 = vunpack.c.l.b16 %v141
    %v181 = vunpack.c.l.b16 %v142
    %v182 = vunpack.c.l.b16 %v143
    %v183 = vunpack.c.l.b16 %v144
    %v184 = vunpack.c.l.b16 %v145
    %v185 = vunpack.c.l.b16 %v146
    %v186 = vunpack.c.l.b16 %v147
    %v187 = vunpack.c.l.b16 %v148
    %v188 = vunpack.c.l.b16 %v149
    %v189 = vunpack.c.l.b16 %v150
    %v190 = vunpack.c.l.b16 %v151
    %v191 = vunpack.c.l.b16 %v152
    %v192 = vunpack.c.l.b16 %v153
    %v193 = vunpack.c.l.b16 %v154
    %v194 = vunpack.c.l.b16 %v155
    %v195 = vunpack.c.l.b16 %v156
    %v196 = vpack.c.b16 %v181, %v180
    %v197 = vpack.c.b16 %v183, %v182
    %v198 = vpack.c.b16 %v185, %v184
    %v199 = vpack.c.b16 %v187, %v186
    %v200 = vpack.c.b16 %v189, %v188
    %v201 = vpack.c.b16 %v191, %v190
    %v202 = vpack.c.b16 %v193, %v192
    %v203 = vpack.c.b16 %v195, %v194
    %212 = vmatprep.subr.bf16.mxu0 0
    %213 = vmatpush1.bf16.msra.mxu0 %v196
    %214 = vmatprep.subr.bf16.mxu0 0
    %215 = vmatpush1.bf16.msra.mxu0 %v197
    %216 = vmatprep.subr.bf16.mxu0 0
    %217 = vmatpush1.bf16.msra.mxu0 %v198
    %218 = vmatprep.subr.bf16.mxu0 0
    %219 = vmatpush1.bf16.msra.mxu0 %v199
    %220 = vmatprep.subr.bf16.mxu0 0
    %221 = vmatpush1.bf16.msra.mxu0 %v200
    %222 = vmatprep.subr.bf16.mxu0 0
    %223 = vmatpush1.bf16.msra.mxu0 %v201
    %224 = vmatprep.subr.bf16.mxu0 0
    %225 = vmatpush1.bf16.msra.mxu0 %v202
    %226 = vmatprep.subr.bf16.mxu0 0
    %227 = vmatpush1.bf16.msra.mxu0 %v203
    %228 = vmatprep.subr.bf16.mxu0 0
    %229 = vmatpush1.bf16.msra.mxu0 0
    %230 = vmatprep.subr.bf16.mxu0 0
    %231 = vmatpush1.bf16.msra.mxu0 0
    %232 = vmatprep.subr.bf16.mxu0 0
    %233 = vmatpush1.bf16.msra.mxu0 0
    %234 = vmatprep.subr.bf16.mxu0 0
    %235 = vmatpush1.bf16.msra.mxu0 0
    %236 = vmatprep.subr.bf16.mxu0 0
    %237 = vmatpush1.bf16.msra.mxu0 0
    %238 = vmatprep.subr.bf16.mxu0 0
    %239 = vmatpush1.bf16.msra.mxu0 0
    %240 = vmatprep.subr.bf16.mxu0 0
    %241 = vmatpush1.bf16.msra.mxu0 0
    %242 = vmatprep.subr.bf16.mxu0 0
    %243 = vmatpush1.bf16.msra.mxu0 0
    %244 = vmatprep.mubr.bf16.mxu0 0
    %245 = vmatmul.mubr.bf16.gmra.mrb[0].mxu0 %v140
    %v246 = vpop.f32.mrb[0].mxu0
    %v247 = vadd.f32 %v162, %v246
    %v248 = vpop.f32.mrb[0].mxu0
    %v249 = vpop.f32.mrb[0].mxu0
    %v250 = vadd.f32 %v162, %v249
    %v251 = vpop.f32.mrb[0].mxu0
    %252 = vdwg.mxu0
    %v253 = vlaneseq
    %v254 = vand.u32 %v253, 127
    %vm255 = vcmp.ge.s32.totalorder %v254, 2
    %vm256 = vcmp.lt.s32.totalorder %v254, 7
    %vm257 = vmand %vm255, %vm256
    %v258 = vxor.u32 %v247, 2147483648
    %v259 = vxor.u32 %v250, 2147483648
    %v260 = vmul.f32 %v258, 1.442695
    %v261 = vpow.pop %v260
    %v262 = vmul.f32 %v259, 1.442695
    %v263 = vpow.pop %v262
    %v264 = vadd.f32 %v261, 1.0
    %v265 = vadd.f32 %v263, 1.0
    %v266 = vrcp.pop %v264
    %v267 = vmul.f32 1.0, %v266
    %v268 = vrcp.pop %v265
    %v269 = vmul.f32 1.0, %v268
    %v270 = vsel %vm257, %v267, %v247
    %v271 = vsel %vm257, %v269, %v250
    %272 = vst [vmem:[#allocation8] sm:$0xff] %v270
    %273 = vst [vmem:[#allocation8 + $0x8] sm:$0xff] %v271
    // Predicated region
    $region34: #{tpu_custom_call.1} parent=1 // pred_check
      _
    $region35: #{tpu_custom_call.1} parent=1 // pred_check_branch
      %275 = sbr.rel (0) target = $region37
    $region36: #{tpu_custom_call.1} parent=1 // pred_region
      %s277 = ssub.s32 256, 256
      %278 = vsyncadd [#allocation4], %s277
      %s279 = sshll.u32 [#allocation8], 4
      %s280 = int_to_ptr.vmem [resolvable:$true] %s279
      %285 = dma.vmem_to_hbm [thread:$0]  %s280, 256, %s5, [#allocation4], 128, 128, 8
    $region37: #{tpu_custom_call.1} parent=1 // pred_fallthru
      _
    // Predicated region
    $region38: #{tpu_custom_call.1} parent=1 // pred_check
      _
    $region39: #{tpu_custom_call.1} parent=1 // pred_check_branch
      %287 = sbr.rel (0) target = $region41
    $region40: #{tpu_custom_call.1} parent=1 // pred_region
      %288 = dma.done [#allocation4], 256
    $region41: #{tpu_custom_call.1} parent=1 // pred_fallthru
      _
    %289 = vsyncpa [#allocation3], 1
    %290 = vsyncpa [#allocation6], 1
    %291 = vsyncpa [#allocation4], 1

</llo_original>
